<compile_context>
chip_gen: v6e
topology: v6e:2x2x1
jax: 0.10.0
libtpu: 0.0.40
codegen_flags: <defaults>
</compile_context>

<pallas_src>
import jax
import jax.numpy as jnp
from jax.experimental import pallas as pl
from jax.experimental.pallas import tpu as pltpu


def wide_deep_kernel(bhead_ref, wide_ref, deep_ref,
                     w1_ref, b1_ref, w2_ref, b2_ref,
                     w3r_ref, wwr_ref, out_ref):
    # Deep tower: the two "fat" matmuls run on the MXU, accumulating in f32.
    h1 = jnp.dot(deep_ref[...], w1_ref[...],
                 preferred_element_type=jnp.float32) + b1_ref[...]
    h1 = jnp.maximum(h1, 0.0)
    h2 = jnp.dot(h1.astype(w2_ref.dtype), w2_ref[...],
                 preferred_element_type=jnp.float32) + b2_ref[...]
    h2 = jnp.maximum(h2, 0.0)

    # Fused N=1 heads: VPU multiply + lane reduce (keeps the MXU free);
    # wide bias + final deep bias are folded into one SMEM scalar.
    deep_head = jnp.sum(h2 * w3r_ref[...], axis=-1, keepdims=True)
    wide_head = jnp.sum(wide_ref[...].astype(jnp.float32) * wwr_ref[...],
                        axis=-1, keepdims=True)
    z = deep_head + wide_head + bhead_ref[0]

    # Sigmoid via EUP exp + approximate reciprocal (no full-precision divide).
    out_ref[...] = pl.reciprocal(1.0 + jnp.exp(-z), approx=True)


def _round_up(x, m):
    return (x + m - 1) // m * m


def wide_and_deep_forward(wide_input, deep_input, params, *, tb=512,
                          use_bf16=True):
    """Fused Wide&Deep forward.  params hold (in, out) weights / (1, out) biases.

    tb: batch tile size (rows per grid step).  Keep TB * (wide+deep+h1+h2) * 4B
        comfortably inside the scoped VMEM budget (32 MiB default; v7x has only
        64 MiB physical) -- with these model sizes 512 is tiny.
    """
    B, wide_dim = wide_input.shape
    _, deep_dim = deep_input.shape
    h1 = params["w1"].shape[1]
    h2 = params["w2"].shape[1]

    # Tile size: multiple of 8 sublanes, capped by the (padded) batch.
    tb = max(8, min(int(tb), _round_up(B, 8)))
    tb = _round_up(tb, 8)
    Bp = _round_up(B, tb)

    mm_dtype = jnp.bfloat16 if use_bf16 else jnp.float32
    wide_x = wide_input.astype(mm_dtype)
    deep_x = deep_input.astype(mm_dtype)
    if Bp != B:
        pad = Bp - B
        wide_x = jnp.pad(wide_x, ((0, pad), (0, 0)))
        deep_x = jnp.pad(deep_x, ((0, pad), (0, 0)))

    w1 = params["w1"].astype(mm_dtype)                                # (deep, h1)
    b1 = params["b1"].astype(jnp.float32)                             # (1, h1)
    w2 = params["w2"].astype(mm_dtype)                                # (h1, h2)
    b2 = params["b2"].astype(jnp.float32)                             # (1, h2)
    w3_row = params["w3"].reshape(1, h2).astype(jnp.float32)          # (1, h2)
    ww_row = params["ww"].reshape(1, wide_dim).astype(jnp.float32)    # (1, wide)
    b_head = (params["wb"] + params["b3"]).reshape(1).astype(jnp.float32)

    args = (b_head, wide_x, deep_x, w1, b1, w2, b2, w3_row, ww_row)

    def resident(a):  # whole array, constant index map -> stays in VMEM
        return pl.BlockSpec(a.shape, lambda i: (0,) * a.ndim)

    in_specs = [
        pl.BlockSpec(memory_space=pltpu.MemorySpace.SMEM),   # fused head bias
        pl.BlockSpec((tb, wide_dim), lambda i: (i, 0)),      # wide input tile
        pl.BlockSpec((tb, deep_dim), lambda i: (i, 0)),      # deep input tile
        resident(w1), resident(b1), resident(w2), resident(b2),
        resident(w3_row), resident(ww_row),
    ]
    out_specs = pl.BlockSpec((tb, 1), lambda i: (i, 0))

    flops = 2 * Bp * (deep_dim * h1 + h1 * h2 + h2 + wide_dim)
    bytes_accessed = sum(int(a.size) * a.dtype.itemsize for a in args) + Bp * 4
    cost = pl.CostEstimate(flops=int(flops), transcendentals=int(Bp),
                           bytes_accessed=int(bytes_accessed))

    out = pl.pallas_call(
        wide_deep_kernel,
        out_shape=jax.ShapeDtypeStruct((Bp, 1), jnp.float32),
        grid=(Bp // tb,),
        in_specs=in_specs,
        out_specs=out_specs,
        compiler_params=pltpu.CompilerParams(
            dimension_semantics=("parallel",)),
        cost_estimate=cost,
    )(*args)
    return out[:B]


def init_params(key, wide_dim, deep_dim):
    """Deterministic synthetic parameters matching the PyTorch module shapes."""
    h1 = deep_dim // 2
    h2 = deep_dim // 4
    ks = jax.random.split(key, 8)

    def linear(kw, kb, fan_in, fan_out):
        # PyTorch Linear stores W as (out, in); we keep the transposed (in, out).
        bound = 1.0 / jnp.sqrt(fan_in)
        w = jax.random.uniform(kw, (fan_in, fan_out), jnp.float32, -bound, bound)
        b = jax.random.uniform(kb, (1, fan_out), jnp.float32, -bound, bound)
        return w, b

    ww, wb = linear(ks[0], ks[1], wide_dim, 1)
    w1, b1 = linear(ks[2], ks[3], deep_dim, h1)
    w2, b2 = linear(ks[4], ks[5], h1, h2)
    w3, b3 = linear(ks[6], ks[7], h2, 1)
    return {"ww": ww, "wb": wb, "w1": w1, "b1": b1,
            "w2": w2, "b2": b2, "w3": w3, "b3": b3}


def reference_forward(wide_input, deep_input, p):
    wide_out = wide_input @ p["ww"] + p["wb"]
    h1 = jnp.maximum(deep_input @ p["w1"] + p["b1"], 0.0)
    h2 = jnp.maximum(h1 @ p["w2"] + p["b2"], 0.0)
    deep_out = h2 @ p["w3"] + p["b3"]
    return jax.nn.sigmoid(wide_out + deep_out)


if __name__ == "__main__":
    key = jax.random.PRNGKey(0)
    k_in1, k_in2, k_param = jax.random.split(key, 3)

    B = 64
    WIDE_DIM = 32
    DEEP_DIM = 64

    wide_input = jax.random.normal(k_in1, (B, WIDE_DIM), jnp.float32)
    deep_input = jax.random.normal(k_in2, (B, DEEP_DIM), jnp.float32)
    params = init_params(k_param, WIDE_DIM, DEEP_DIM)

    ref = reference_forward(wide_input, deep_input, params)

    # f32 path, small tile -> grid of 4 batch steps exercises the pipeline.
    out_f32 = wide_and_deep_forward(wide_input, deep_input, params,
                                    tb=16, use_bf16=False)
    out_f32 = jax.block_until_ready(out_f32)
    assert out_f32.shape == (B, 1), out_f32.shape
    assert jnp.allclose(out_f32, ref, atol=5e-3, rtol=0.0), \
        float(jnp.max(jnp.abs(out_f32 - ref)))

    # bf16 inputs/weights (the v6e/v7x fast path): looser tolerance for the cast.
    out_bf16 = wide_and_deep_forward(wide_input, deep_input, params,
                                     tb=16, use_bf16=True)
    out_bf16 = jax.block_until_ready(out_bf16)
    assert out_bf16.shape == (B, 1), out_bf16.shape
    assert jnp.allclose(out_bf16, ref, atol=2e-2, rtol=0.0), \
        float(jnp.max(jnp.abs(out_bf16 - ref)))

    print("KERNEL_OK")
</pallas_src>

<mosaic_0001>
module attributes {stable_mosaic.version = 11 : i64} {
  func.func @wide_deep_kernel(%arg0: i32, %arg1: memref<1xf32, #tpu.memory_space<smem>>, %arg2: memref<16x32xf32, #tpu.memory_space<vmem>>, %arg3: memref<16x64xf32, #tpu.memory_space<vmem>>, %arg4: memref<64x32xf32, #tpu.memory_space<vmem>>, %arg5: memref<1x32xf32, #tpu.memory_space<vmem>>, %arg6: memref<32x16xf32, #tpu.memory_space<vmem>>, %arg7: memref<1x16xf32, #tpu.memory_space<vmem>>, %arg8: memref<1x16xf32, #tpu.memory_space<vmem>>, %arg9: memref<1x32xf32, #tpu.memory_space<vmem>>, %arg10: memref<16x1xf32, #tpu.memory_space<vmem>>) attributes {dimension_semantics = [#tpu.dimension_semantics<parallel>], iteration_bounds = array<i64: 4>, scalar_prefetch = 0 : i64, scratch_operands = 0 : i64, tpu.core_type = #tpu.core_type<tc>, window_params = [{transform_indices = @transform_0, window_bounds = array<i64: 1>}, {transform_indices = @transform_1, window_bounds = array<i64: 16, 32>}, {transform_indices = @transform_2, window_bounds = array<i64: 16, 64>}, {pipeline_mode = #tpu.pipeline_mode<synchronous>, transform_indices = @transform_3, window_bounds = array<i64: 64, 32>}, {pipeline_mode = #tpu.pipeline_mode<synchronous>, transform_indices = @transform_4, window_bounds = array<i64: 1, 32>}, {pipeline_mode = #tpu.pipeline_mode<synchronous>, transform_indices = @transform_5, window_bounds = array<i64: 32, 16>}, {pipeline_mode = #tpu.pipeline_mode<synchronous>, transform_indices = @transform_6, window_bounds = array<i64: 1, 16>}, {pipeline_mode = #tpu.pipeline_mode<synchronous>, transform_indices = @transform_7, window_bounds = array<i64: 1, 16>}, {pipeline_mode = #tpu.pipeline_mode<synchronous>, transform_indices = @transform_8, window_bounds = array<i64: 1, 32>}, {transform_indices = @transform_9, window_bounds = array<i64: 16, 1>}]} {
    %c0 = arith.constant 0 : index
    %c0_0 = arith.constant 0 : index
    %0 = vector.load %arg3[%c0, %c0_0] : memref<16x64xf32, #tpu.memory_space<vmem>>, vector<16x64xf32>
    %c0_1 = arith.constant 0 : index
    %c0_2 = arith.constant 0 : index
    %1 = vector.load %arg4[%c0_1, %c0_2] : memref<64x32xf32, #tpu.memory_space<vmem>>, vector<64x32xf32>
    %cst = arith.constant dense<0.000000e+00> : vector<16x32xf32>
    %2 = tpu.matmul %0, %1, %cst {dimension_numbers = #tpu.dot_dimension_numbers<[1], [0], [0], [1], [0, 0, 1, 1], [], []>} : vector<16x64xf32>, vector<64x32xf32>, vector<16x32xf32> -> vector<16x32xf32>
    %c0_3 = arith.constant 0 : index
    %c0_4 = arith.constant 0 : index
    %3 = vector.load %arg5[%c0_3, %c0_4] : memref<1x32xf32, #tpu.memory_space<vmem>>, vector<1x32xf32>
    %4 = vector.broadcast %3 : vector<1x32xf32> to vector<16x32xf32>
    %5 = arith.addf %2, %4 : vector<16x32xf32>
    %cst_5 = arith.constant 0.000000e+00 : f32
    %6 = vector.broadcast %cst_5 : f32 to vector<16x32xf32>
    %7 = arith.maximumf %5, %6 : vector<16x32xf32>
    %c0_6 = arith.constant 0 : index
    %c0_7 = arith.constant 0 : index
    %8 = vector.load %arg6[%c0_6, %c0_7] : memref<32x16xf32, #tpu.memory_space<vmem>>, vector<32x16xf32>
    %cst_8 = arith.constant dense<0.000000e+00> : vector<16x16xf32>
    %9 = tpu.matmul %7, %8, %cst_8 {dimension_numbers = #tpu.dot_dimension_numbers<[1], [0], [0], [1], [0, 0, 1, 1], [], []>} : vector<16x32xf32>, vector<32x16xf32>, vector<16x16xf32> -> vector<16x16xf32>
    %c0_9 = arith.constant 0 : index
    %c0_10 = arith.constant 0 : index
    %10 = vector.load %arg7[%c0_9, %c0_10] : memref<1x16xf32, #tpu.memory_space<vmem>>, vector<1x16xf32>
    %11 = vector.broadcast %10 : vector<1x16xf32> to vector<16x16xf32>
    %12 = arith.addf %9, %11 : vector<16x16xf32>
    %cst_11 = arith.constant 0.000000e+00 : f32
    %13 = vector.broadcast %cst_11 : f32 to vector<16x16xf32>
    %14 = arith.maximumf %12, %13 : vector<16x16xf32>
    %c0_12 = arith.constant 0 : index
    %c0_13 = arith.constant 0 : index
    %15 = vector.load %arg8[%c0_12, %c0_13] : memref<1x16xf32, #tpu.memory_space<vmem>>, vector<1x16xf32>
    %16 = vector.broadcast %15 : vector<1x16xf32> to vector<16x16xf32>
    %17 = arith.mulf %14, %16 : vector<16x16xf32>
    %cst_14 = arith.constant dense<0.000000e+00> : vector<16xf32>
    %18 = vector.multi_reduction <add>, %17, %cst_14 [1] : vector<16x16xf32> to vector<16xf32>
    %19 = vector.shape_cast %18 : vector<16xf32> to vector<16x1xf32>
    %c0_15 = arith.constant 0 : index
    %c0_16 = arith.constant 0 : index
    %20 = vector.load %arg2[%c0_15, %c0_16] : memref<16x32xf32, #tpu.memory_space<vmem>>, vector<16x32xf32>
    %c0_17 = arith.constant 0 : index
    %c0_18 = arith.constant 0 : index
    %21 = vector.load %arg9[%c0_17, %c0_18] : memref<1x32xf32, #tpu.memory_space<vmem>>, vector<1x32xf32>
    %22 = vector.broadcast %21 : vector<1x32xf32> to vector<16x32xf32>
    %23 = arith.mulf %20, %22 : vector<16x32xf32>
    %cst_19 = arith.constant dense<0.000000e+00> : vector<16xf32>
    %24 = vector.multi_reduction <add>, %23, %cst_19 [1] : vector<16x32xf32> to vector<16xf32>
    %25 = vector.shape_cast %24 : vector<16xf32> to vector<16x1xf32>
    %26 = arith.addf %19, %25 : vector<16x1xf32>
    %c0_20 = arith.constant 0 : index
    %27 = memref.load %arg1[%c0_20] : memref<1xf32, #tpu.memory_space<smem>>
    %28 = vector.broadcast %27 : f32 to vector<16x1xf32>
    %29 = arith.addf %26, %28 : vector<16x1xf32>
    %cst_21 = arith.constant 0.000000e+00 : f32
    %30 = vector.broadcast %cst_21 : f32 to vector<16x1xf32>
    %31 = arith.subf %30, %29 : vector<16x1xf32>
    %32 = math.exp %31 : vector<16x1xf32>
    %cst_22 = arith.constant 1.000000e+00 : f32
    %33 = vector.broadcast %cst_22 : f32 to vector<16x1xf32>
    %34 = arith.addf %33, %32 : vector<16x1xf32>
    %35 = tpu.reciprocal %34 {approx = true} : vector<16x1xf32> -> vector<16x1xf32>
    %c0_23 = arith.constant 0 : index
    %c0_24 = arith.constant 0 : index
    %36 = vector.load %arg10[%c0_23, %c0_24] : memref<16x1xf32, #tpu.memory_space<vmem>>, vector<16x1xf32>
    tpu.vector_store %arg10[%c0_23, %c0_24], %35 {strides = array<i32>} : memref<16x1xf32, #tpu.memory_space<vmem>>, vector<16x1xf32>,
    return
  }
  func.func @transform_0(%arg0: i32) -> i32 {
    %c0_i32 = arith.constant 0 : i32
    %c0_i32_0 = arith.constant 0 : i32
    return %c0_i32 : i32
  }
  func.func @transform_1(%arg0: i32) -> (i32, i32) {
    %c0_i32 = arith.constant 0 : i32
    %c0_i32_0 = arith.constant 0 : i32
    return %arg0, %c0_i32 : i32, i32
  }
  func.func @transform_2(%arg0: i32) -> (i32, i32) {
    %c0_i32 = arith.constant 0 : i32
    %c0_i32_0 = arith.constant 0 : i32
    return %arg0, %c0_i32 : i32, i32
  }
  func.func @transform_3(%arg0: i32) -> (i32, i32) {
    %c0_i32 = arith.constant 0 : i32
    %c0_i32_0 = arith.constant 0 : i32
    %c0_i32_1 = arith.constant 0 : i32
    return %c0_i32, %c0_i32_0 : i32, i32
  }
  func.func @transform_4(%arg0: i32) -> (i32, i32) {
    %c0_i32 = arith.constant 0 : i32
    %c0_i32_0 = arith.constant 0 : i32
    %c0_i32_1 = arith.constant 0 : i32
    return %c0_i32, %c0_i32_0 : i32, i32
  }
  func.func @transform_5(%arg0: i32) -> (i32, i32) {
    %c0_i32 = arith.constant 0 : i32
    %c0_i32_0 = arith.constant 0 : i32
    %c0_i32_1 = arith.constant 0 : i32
    return %c0_i32, %c0_i32_0 : i32, i32
  }
  func.func @transform_6(%arg0: i32) -> (i32, i32) {
    %c0_i32 = arith.constant 0 : i32
    %c0_i32_0 = arith.constant 0 : i32
    %c0_i32_1 = arith.constant 0 : i32
    return %c0_i32, %c0_i32_0 : i32, i32
  }
  func.func @transform_7(%arg0: i32) -> (i32, i32) {
    %c0_i32 = arith.constant 0 : i32
    %c0_i32_0 = arith.constant 0 : i32
    %c0_i32_1 = arith.constant 0 : i32
    return %c0_i32, %c0_i32_0 : i32, i32
  }
  func.func @transform_8(%arg0: i32) -> (i32, i32) {
    %c0_i32 = arith.constant 0 : i32
    %c0_i32_0 = arith.constant 0 : i32
    %c0_i32_1 = arith.constant 0 : i32
    return %c0_i32, %c0_i32_0 : i32, i32
  }
  func.func @transform_9(%arg0: i32) -> (i32, i32) {
    %c0_i32 = arith.constant 0 : i32
    %c0_i32_0 = arith.constant 0 : i32
    return %arg0, %c0_i32 : i32, i32
  }
}

</mosaic_0001>

<llo_original>
// kernel: tpu_custom_call.1
$region0: #{tpu_custom_call.1}
  #allocation0 [shape = 'u32[]', space=smem, size = 0x4, offset = 0x4, fixed_abs, tag = 'smem constant byte address 0x4 - core index']
  #allocation1 [shape = 'u32[144,128]{1,0:T(1,128)}', space=vmem, size = 0x12000, scoped, tag = 'internal scratch']
  #allocation2 [shape = 'f32[1]{0:T(128)S(6)}', space=smem, size = 0x200, scoped, tag = 'scoped memory for tpu_custom_call.1']
  %s0 = inlined_call_operand.<no memory space> [shape: f32[1], index: 0, kind: input, shape index: {}]
  %s1 = inlined_call_operand.vmem [shape: f32[64,32], index: 1, kind: input, shape index: {}]
  %s2 = inlined_call_operand.vmem [shape: f32[64,64], index: 2, kind: input, shape index: {}]
  %s3 = inlined_call_operand.vmem [shape: f32[64,32], index: 3, kind: input, shape index: {}]
  %s4 = inlined_call_operand.vmem [shape: f32[1,32], index: 4, kind: input, shape index: {}]
  %s5 = inlined_call_operand.vmem [shape: f32[32,16], index: 5, kind: input, shape index: {}]
  %s6 = inlined_call_operand.vmem [shape: f32[1,16], index: 6, kind: input, shape index: {}]
  %s7 = inlined_call_operand.vmem [shape: f32[1,16], index: 7, kind: input, shape index: {}]
  %s8 = inlined_call_operand.vmem [shape: f32[1,32], index: 8, kind: input, shape index: {}]
  %s9 = inlined_call_operand.vmem [shape: f32[64,1], index: 9, kind: output, shape index: {}]
  %s10 = sld [smem:[#allocation0]]
  $region69: #{tpu_custom_call.1} parent=0
    _
  %s12 = ssub.s32 1, %s10
  %s13 = scalar_select 0, %s12, %s10
  %14 = sst [smem:[#allocation2]] %s0
  loop: start=0, step=1, limit=6
  $region2: #{tpu_custom_call.1} parent=0 // loop_pre_header
    _
  $region3: #{tpu_custom_call.1} parent=0 // loop_header
    %s16 = sphi 0, %s20
    %p17 = scmp.ge.s32.totalorder %s16, 6
    %s24 = sphi 0, %s24
    %s26 = sphi 0, %s24
    %s27 = sphi 0, %s26
    %s41 = sphi 0, %s27
    %s47 = sphi 0, %s49
    %s50 = sphi 0, %s47
    %s51 = sphi 0, %s50
    %s67 = sphi 0, %s51
    %s73 = sphi 0, %s75
    %s76 = sphi 0, %s73
    %s77 = sphi 0, %s76
    %s93 = sphi 0, %s77
    %s97 = sphi 0, %s97
    %s99 = sphi 0, %s97
    %s100 = sphi 0, %s99
    %s114 = sphi 0, %s100
    %s118 = sphi 0, %s118
    %s120 = sphi 0, %s118
    %s121 = sphi 0, %s120
    %s135 = sphi 0, %s121
    %s139 = sphi 0, %s139
    %s141 = sphi 0, %s139
    %s142 = sphi 0, %s141
    %s156 = sphi 0, %s142
    %s160 = sphi 0, %s160
    %s162 = sphi 0, %s160
    %s163 = sphi 0, %s162
    %s177 = sphi 0, %s163
    %s181 = sphi 0, %s181
    %s183 = sphi 0, %s181
    %s184 = sphi 0, %s183
    %s198 = sphi 0, %s184
    %s202 = sphi 0, %s202
    %s204 = sphi 0, %s202
    %s205 = sphi 0, %s204
    %s219 = sphi 0, %s205
    %s225 = sphi 0, %s227
    %s228 = sphi 0, %s225
    %s229 = sphi 0, %s228
    %s245 = sphi 0, %s229
  $region4: #{tpu_custom_call.1} parent=0 // loop_header_branch
    %19 = sbr.rel (%p17) target = $region8
  $region5: #{tpu_custom_call.1} parent=0 // loop_body
    %s21 = ssub.s32 %s16, 1
    %s22 = ssub.s32 %s16, 2
    %s23 = sadd.s32 %s16, 1
    %s25 = sadd.s32 %s24, 1
    %p28 = scmp.eq.s32.totalorder %s16, 3
    %p29 = scmp.ne.s32.totalorder %s24, %s26
    %p30 = scmp.eq.s32.totalorder %s16, 0
    %p31 = por %p29, %p30
    %p32 = scmp.ne.s32.totalorder %s24, %s26
    %p33 = scmp.eq.s32.totalorder %s21, 3
    %p34 = por %p32, %p33
    %p35 = scmp.ne.s32.totalorder %s26, %s27
    %p36 = scmp.eq.s32.totalorder %s21, 0
    %p37 = por %p35, %p36
    %p38 = scmp.ne.s32.totalorder %s26, %s27
    %p39 = scmp.eq.s32.totalorder %s22, 3
    %p40 = por %p38, %p39
    %p42 = scmp.ne.s32.totalorder %s27, %s41
    %p43 = scmp.eq.s32.totalorder %s22, 0
    %p44 = por %p42, %p43
    %s45 = ssub.s32 %s16, %s23
    %p46 = scmp.eq.s32.totalorder %s45, 0
    %s48 = sadd.s32 %s47, 1
    %s49 = scalar_select %p46, %s47, %s48
    %p52 = pneg %p46
    %p53 = scmp.eq.s32.totalorder %s16, 3
    %p54 = por %p52, %p53
    %p55 = scmp.ne.s32.totalorder %s47, %s50
    %p56 = scmp.eq.s32.totalorder %s16, 0
    %p57 = por %p55, %p56
    %p58 = scmp.ne.s32.totalorder %s47, %s50
    %p59 = scmp.eq.s32.totalorder %s21, 3
    %p60 = por %p58, %p59
    %p61 = scmp.ne.s32.totalorder %s50, %s51
    %p62 = scmp.eq.s32.totalorder %s21, 0
    %p63 = por %p61, %p62
    %p64 = scmp.ne.s32.totalorder %s50, %s51
    %p65 = scmp.eq.s32.totalorder %s22, 3
    %p66 = por %p64, %p65
    %p68 = scmp.ne.s32.totalorder %s51, %s67
    %p69 = scmp.eq.s32.totalorder %s22, 0
    %p70 = por %p68, %p69
    %s71 = ssub.s32 %s16, %s23
    %p72 = scmp.eq.s32.totalorder %s71, 0
    %s74 = sadd.s32 %s73, 1
    %s75 = scalar_select %p72, %s73, %s74
    %p78 = pneg %p72
    %p79 = scmp.eq.s32.totalorder %s16, 3
    %p80 = por %p78, %p79
    %p81 = scmp.ne.s32.totalorder %s73, %s76
    %p82 = scmp.eq.s32.totalorder %s16, 0
    %p83 = por %p81, %p82
    %p84 = scmp.ne.s32.totalorder %s73, %s76
    %p85 = scmp.eq.s32.totalorder %s21, 3
    %p86 = por %p84, %p85
    %p87 = scmp.ne.s32.totalorder %s76, %s77
    %p88 = scmp.eq.s32.totalorder %s21, 0
    %p89 = por %p87, %p88
    %p90 = scmp.ne.s32.totalorder %s76, %s77
    %p91 = scmp.eq.s32.totalorder %s22, 3
    %p92 = por %p90, %p91
    %p94 = scmp.ne.s32.totalorder %s77, %s93
    %p95 = scmp.eq.s32.totalorder %s22, 0
    %p96 = por %p94, %p95
    %s98 = sadd.s32 %s97, 1
    %p101 = scmp.eq.s32.totalorder %s16, 3
    %p102 = scmp.ne.s32.totalorder %s97, %s99
    %p103 = scmp.eq.s32.totalorder %s16, 0
    %p104 = por %p102, %p103
    %p105 = scmp.ne.s32.totalorder %s97, %s99
    %p106 = scmp.eq.s32.totalorder %s21, 3
    %p107 = por %p105, %p106
    %p108 = scmp.ne.s32.totalorder %s99, %s100
    %p109 = scmp.eq.s32.totalorder %s21, 0
    %p110 = por %p108, %p109
    %p111 = scmp.ne.s32.totalorder %s99, %s100
    %p112 = scmp.eq.s32.totalorder %s22, 3
    %p113 = por %p111, %p112
    %p115 = scmp.ne.s32.totalorder %s100, %s114
    %p116 = scmp.eq.s32.totalorder %s22, 0
    %p117 = por %p115, %p116
    %s119 = sadd.s32 %s118, 1
    %p122 = scmp.eq.s32.totalorder %s16, 3
    %p123 = scmp.ne.s32.totalorder %s118, %s120
    %p124 = scmp.eq.s32.totalorder %s16, 0
    %p125 = por %p123, %p124
    %p126 = scmp.ne.s32.totalorder %s118, %s120
    %p127 = scmp.eq.s32.totalorder %s21, 3
    %p128 = por %p126, %p127
    %p129 = scmp.ne.s32.totalorder %s120, %s121
    %p130 = scmp.eq.s32.totalorder %s21, 0
    %p131 = por %p129, %p130
    %p132 = scmp.ne.s32.totalorder %s120, %s121
    %p133 = scmp.eq.s32.totalorder %s22, 3
    %p134 = por %p132, %p133
    %p136 = scmp.ne.s32.totalorder %s121, %s135
    %p137 = scmp.eq.s32.totalorder %s22, 0
    %p138 = por %p136, %p137
    %s140 = sadd.s32 %s139, 1
    %p143 = scmp.eq.s32.totalorder %s16, 3
    %p144 = scmp.ne.s32.totalorder %s139, %s141
    %p145 = scmp.eq.s32.totalorder %s16, 0
    %p146 = por %p144, %p145
    %p147 = scmp.ne.s32.totalorder %s139, %s141
    %p148 = scmp.eq.s32.totalorder %s21, 3
    %p149 = por %p147, %p148
    %p150 = scmp.ne.s32.totalorder %s141, %s142
    %p151 = scmp.eq.s32.totalorder %s21, 0
    %p152 = por %p150, %p151
    %p153 = scmp.ne.s32.totalorder %s141, %s142
    %p154 = scmp.eq.s32.totalorder %s22, 3
    %p155 = por %p153, %p154
    %p157 = scmp.ne.s32.totalorder %s142, %s156
    %p158 = scmp.eq.s32.totalorder %s22, 0
    %p159 = por %p157, %p158
    %s161 = sadd.s32 %s160, 1
    %p164 = scmp.eq.s32.totalorder %s16, 3
    %p165 = scmp.ne.s32.totalorder %s160, %s162
    %p166 = scmp.eq.s32.totalorder %s16, 0
    %p167 = por %p165, %p166
    %p168 = scmp.ne.s32.totalorder %s160, %s162
    %p169 = scmp.eq.s32.totalorder %s21, 3
    %p170 = por %p168, %p169
    %p171 = scmp.ne.s32.totalorder %s162, %s163
    %p172 = scmp.eq.s32.totalorder %s21, 0
    %p173 = por %p171, %p172
    %p174 = scmp.ne.s32.totalorder %s162, %s163
    %p175 = scmp.eq.s32.totalorder %s22, 3
    %p176 = por %p174, %p175
    %p178 = scmp.ne.s32.totalorder %s163, %s177
    %p179 = scmp.eq.s32.totalorder %s22, 0
    %p180 = por %p178, %p179
    %s182 = sadd.s32 %s181, 1
    %p185 = scmp.eq.s32.totalorder %s16, 3
    %p186 = scmp.ne.s32.totalorder %s181, %s183
    %p187 = scmp.eq.s32.totalorder %s16, 0
    %p188 = por %p186, %p187
    %p189 = scmp.ne.s32.totalorder %s181, %s183
    %p190 = scmp.eq.s32.totalorder %s21, 3
    %p191 = por %p189, %p190
    %p192 = scmp.ne.s32.totalorder %s183, %s184
    %p193 = scmp.eq.s32.totalorder %s21, 0
    %p194 = por %p192, %p193
    %p195 = scmp.ne.s32.totalorder %s183, %s184
    %p196 = scmp.eq.s32.totalorder %s22, 3
    %p197 = por %p195, %p196
    %p199 = scmp.ne.s32.totalorder %s184, %s198
    %p200 = scmp.eq.s32.totalorder %s22, 0
    %p201 = por %p199, %p200
    %s203 = sadd.s32 %s202, 1
    %p206 = scmp.eq.s32.totalorder %s16, 3
    %p207 = scmp.ne.s32.totalorder %s202, %s204
    %p208 = scmp.eq.s32.totalorder %s16, 0
    %p209 = por %p207, %p208
    %p210 = scmp.ne.s32.totalorder %s202, %s204
    %p211 = scmp.eq.s32.totalorder %s21, 3
    %p212 = por %p210, %p211
    %p213 = scmp.ne.s32.totalorder %s204, %s205
    %p214 = scmp.eq.s32.totalorder %s21, 0
    %p215 = por %p213, %p214
    %p216 = scmp.ne.s32.totalorder %s204, %s205
    %p217 = scmp.eq.s32.totalorder %s22, 3
    %p218 = por %p216, %p217
    %p220 = scmp.ne.s32.totalorder %s205, %s219
    %p221 = scmp.eq.s32.totalorder %s22, 0
    %p222 = por %p220, %p221
    %s223 = ssub.s32 %s16, %s23
    %p224 = scmp.eq.s32.totalorder %s223, 0
    %s226 = sadd.s32 %s225, 1
    %s227 = scalar_select %p224, %s225, %s226
    %p230 = pneg %p224
    %p231 = scmp.eq.s32.totalorder %s16, 3
    %p232 = por %p230, %p231
    %p233 = scmp.ne.s32.totalorder %s225, %s228
    %p234 = scmp.eq.s32.totalorder %s16, 0
    %p235 = por %p233, %p234
    %p236 = scmp.ne.s32.totalorder %s225, %s228
    %p237 = scmp.eq.s32.totalorder %s21, 3
    %p238 = por %p236, %p237
    %p239 = scmp.ne.s32.totalorder %s228, %s229
    %p240 = scmp.eq.s32.totalorder %s21, 0
    %p241 = por %p239, %p240
    %p242 = scmp.ne.s32.totalorder %s228, %s229
    %p243 = scmp.eq.s32.totalorder %s22, 3
    %p244 = por %p242, %p243
    %p246 = scmp.ne.s32.totalorder %s229, %s245
    %p247 = scmp.eq.s32.totalorder %s22, 0
    %p248 = por %p246, %p247
    %p249 = scmp.le.s32.totalorder 1, %s16
    %p250 = scmp.lt.s32.totalorder %s16, 5
    %p251 = pnand %p249, %p250
    %p252 = pneg %p251
    // Predicated region
    $region9: #{tpu_custom_call.1} parent=5 // pred_check
      _
    $region10: #{tpu_custom_call.1} parent=5 // pred_check_branch
      %254 = sbr.rel (%p251) target = $region12
    $region11: #{tpu_custom_call.1} parent=5 // pred_region
      %s255 = ssub.s32 %s16, 1
      // Predicated region
      $region13: #{tpu_custom_call.1} parent=11 // pred_check
        %p256 = pneg %p37
      $region14: #{tpu_custom_call.1} parent=11 // pred_check_branch
        %258 = sbr.rel (%p256) target = $region16
      $region15: #{tpu_custom_call.1} parent=11 // pred_region
        _
      $region16: #{tpu_custom_call.1} parent=11 // pred_fallthru
        _
      // Predicated region
      $region17: #{tpu_custom_call.1} parent=11 // pred_check
        %p259 = pneg %p110
      $region18: #{tpu_custom_call.1} parent=11 // pred_check_branch
        %261 = sbr.rel (%p259) target = $region20
      $region19: #{tpu_custom_call.1} parent=11 // pred_region
        _
      $region20: #{tpu_custom_call.1} parent=11 // pred_fallthru
        _
      // Predicated region
      $region21: #{tpu_custom_call.1} parent=11 // pred_check
        %p262 = pneg %p131
      $region22: #{tpu_custom_call.1} parent=11 // pred_check_branch
        %264 = sbr.rel (%p262) target = $region24
      $region23: #{tpu_custom_call.1} parent=11 // pred_region
        _
      $region24: #{tpu_custom_call.1} parent=11 // pred_fallthru
        _
      // Predicated region
      $region25: #{tpu_custom_call.1} parent=11 // pred_check
        %p265 = pneg %p152
      $region26: #{tpu_custom_call.1} parent=11 // pred_check_branch
        %267 = sbr.rel (%p265) target = $region28
      $region27: #{tpu_custom_call.1} parent=11 // pred_region
        _
      $region28: #{tpu_custom_call.1} parent=11 // pred_fallthru
        _
      // Predicated region
      $region29: #{tpu_custom_call.1} parent=11 // pred_check
        %p268 = pneg %p173
      $region30: #{tpu_custom_call.1} parent=11 // pred_check_branch
        %270 = sbr.rel (%p268) target = $region32
      $region31: #{tpu_custom_call.1} parent=11 // pred_region
        _
      $region32: #{tpu_custom_call.1} parent=11 // pred_fallthru
        _
      // Predicated region
      $region33: #{tpu_custom_call.1} parent=11 // pred_check
        %p271 = pneg %p194
      $region34: #{tpu_custom_call.1} parent=11 // pred_check_branch
        %273 = sbr.rel (%p271) target = $region36
      $region35: #{tpu_custom_call.1} parent=11 // pred_region
        _
      $region36: #{tpu_custom_call.1} parent=11 // pred_fallthru
        _
      // Predicated region
      $region37: #{tpu_custom_call.1} parent=11 // pred_check
        %p274 = pneg %p215
      $region38: #{tpu_custom_call.1} parent=11 // pred_check_branch
        %276 = sbr.rel (%p274) target = $region40
      $region39: #{tpu_custom_call.1} parent=11 // pred_region
        _
      $region40: #{tpu_custom_call.1} parent=11 // pred_fallthru
        _
    $region12: #{tpu_custom_call.1} parent=5 // pred_fallthru
      _
    %p277 = scmp.lt.s32.totalorder %s16, 4
    // Predicated region
    $region41: #{tpu_custom_call.1} parent=5 // pred_check
      %p278 = pneg %p277
    $region42: #{tpu_custom_call.1} parent=5 // pred_check_branch
      %280 = sbr.rel (%p278) target = $region44
    $region43: #{tpu_custom_call.1} parent=5 // pred_region
      // Predicated region
      $region45: #{tpu_custom_call.1} parent=43 // pred_check
        %p281 = pneg %p57
      $region46: #{tpu_custom_call.1} parent=43 // pred_check_branch
        %283 = sbr.rel (%p281) target = $region48
      $region47: #{tpu_custom_call.1} parent=43 // pred_region
        %s284 = smul.u32 2, %s16
        %p285 = scmp.lt.s32.totalorder %s284, 7
        %s286 = scalar_select %p285, %s284, 7
        %s287 = smul.addr %s286, 8
        %s288 = scalar_lea.vmem %s1, %s287
        %s289 = smul.u32 2, %s16
      $region48: #{tpu_custom_call.1} parent=43 // pred_fallthru
        _
      // Predicated region
      $region49: #{tpu_custom_call.1} parent=43 // pred_check
        %p290 = pneg %p83
      $region50: #{tpu_custom_call.1} parent=43 // pred_check_branch
        %292 = sbr.rel (%p290) target = $region52
      $region51: #{tpu_custom_call.1} parent=43 // pred_region
        %s293 = smul.u32 2, %s16
        %p294 = scmp.lt.s32.totalorder %s293, 7
        %s295 = scalar_select %p294, %s293, 7
        %s296 = smul.addr %s295, 8
        %s297 = scalar_lea.vmem %s2, %s296
        %s298 = smul.u32 2, %s16
      $region52: #{tpu_custom_call.1} parent=43 // pred_fallthru
        _
    $region44: #{tpu_custom_call.1} parent=5 // pred_fallthru
      _
    %p299 = scmp.le.s32.totalorder 1, %s16
    %p300 = scmp.lt.s32.totalorder %s16, 5
    %p301 = pnand %p299, %p300
    %p302 = pneg %p301
    // Predicated region
    $region53: #{tpu_custom_call.1} parent=5 // pred_check
      _
    $region54: #{tpu_custom_call.1} parent=5 // pred_check_branch
      %304 = sbr.rel (%p301) target = $region56
    $region55: #{tpu_custom_call.1} parent=5 // pred_region
      %s305 = ssub.s32 %s16, 1
      %p306 = pneg %p37
      %p307 = pneg %p34
      %s308 = smul.u32 2, %s21
      %p309 = scmp.lt.s32.totalorder %s308, 7
      %s310 = scalar_select %p309, %s308, 7
      %s311 = smul.addr %s310, 8
      %s312 = scalar_lea.vmem %s1, %s311
      %p313 = pneg %p63
      %p314 = pneg %p60
      %s315 = smul.u32 2, %s21
      %p316 = scmp.lt.s32.totalorder %s315, 7
      %s317 = scalar_select %p316, %s315, 7
      %s318 = smul.addr %s317, 8
      %s319 = scalar_lea.vmem %s2, %s318
      %p320 = pneg %p89
      %p321 = pneg %p86
      %p322 = pneg %p110
      %p323 = pneg %p107
      %p324 = pneg %p131
      %p325 = pneg %p128
      %p326 = pneg %p152
      %p327 = pneg %p149
      %p328 = pneg %p173
      %p329 = pneg %p170
      %p330 = pneg %p194
      %p331 = pneg %p191
      %p332 = pneg %p215
      %p333 = pneg %p212
      %p334 = pneg %p241
      %p335 = pneg %p238
      %s336 = smul.u32 2, %s21
      %p337 = scmp.lt.s32.totalorder %s336, 7
      %s338 = scalar_select %p337, %s336, 7
      %s339 = smul.addr %s338, 8
      %s340 = scalar_lea.vmem %s9, %s339
      %s341 = smul.u32 2, %s21
      %p342 = scmp.lt.s32.totalorder %s341, 7
      %s343 = scalar_select %p342, %s341, 7
      %s344 = smul.addr %s343, 8
      %s345 = scalar_lea.vmem %s1, %s344
      %s346 = smul.u32 2, %s21
      %s347 = smul.u32 2, %s21
      %p348 = scmp.lt.s32.totalorder %s347, 7
      %s349 = scalar_select %p348, %s347, 7
      %s350 = smul.addr %s349, 8
      %s351 = scalar_lea.vmem %s2, %s350
      %s352 = smul.u32 2, %s21
      %s353 = smul.u32 2, %s21
      %p354 = scmp.lt.s32.totalorder %s353, 7
      %s355 = scalar_select %p354, %s353, 7
      %s356 = smul.addr %s355, 8
      %s357 = scalar_lea.vmem %s9, %s356
      %s358 = smul.u32 2, %s21
      %v359 = vld [vmem:[%s351] sm:$0xff]
      %v360 = vld [vmem:[%s351 + $0x8] sm:$0xff]
      %v361 = vld [vmem:[%s3] sm:$0xff]
      %v362 = vld [vmem:[%s3 + $0x8] sm:$0xff]
      %v363 = vld [vmem:[%s3 + $0x10] sm:$0xff]
      %v364 = vld [vmem:[%s3 + $0x18] sm:$0xff]
      %v365 = vld [vmem:[%s3 + $0x20] sm:$0xff]
      %v366 = vld [vmem:[%s3 + $0x28] sm:$0xff]
      %v367 = vld [vmem:[%s3 + $0x30] sm:$0xff]
      %v368 = vld [vmem:[%s3 + $0x38] sm:$0xff]
      %v369 = vld [vmem:[%s4] sm:$0x1]
      %v371 = vlaneseq
      %v372 = vshrl.u32 %v371, 7
      %v373 = vsub.s32 0, %v372
      %v374 = vrot.slane %v369, %v373
      %vm376 = vcmask 523264
      %v378 = vsel %vm376, %v359, 0
      %v381 = vsel %vm376, %v360, 0
      %383 = vmatprep.subr.mxu0 0.0
      %384 = vmatpush1.msra.mxu0 0.0
      %385 = vmatprep.subr.mxu0 0.0
      %386 = vmatpush1.msra.mxu0 0.0
      %387 = vmatprep.subr.mxu0 0.0
      %388 = vmatpush1.msra.mxu0 0.0
      %389 = vmatprep.subr.mxu0 0.0
      %390 = vmatpush1.msra.mxu0 0.0
      %391 = vmatprep.subr.mxu0 0.0
      %392 = vmatpush1.msra.mxu0 0.0
      %393 = vmatprep.subr.mxu0 0.0
      %394 = vmatpush1.msra.mxu0 0.0
      %395 = vmatprep.subr.mxu0 0.0
      %396 = vmatpush1.msra.mxu0 0.0
      %397 = vmatprep.subr.mxu0 0.0
      %398 = vmatpush1.msra.mxu0 0.0
      %399 = vmatprep.subr.mxu0 0.0
      %400 = vmatpush1.msra.mxu0 %v368
      %401 = vmatprep.subr.mxu0 0.0
      %402 = vmatpush1.msra.mxu0 %v367
      %403 = vmatprep.subr.mxu0 0.0
      %404 = vmatpush1.msra.mxu0 %v366
      %405 = vmatprep.subr.mxu0 0.0
      %406 = vmatpush1.msra.mxu0 %v365
      %407 = vmatprep.subr.mxu0 0.0
      %408 = vmatpush1.msra.mxu0 %v364
      %409 = vmatprep.subr.mxu0 0.0
      %410 = vmatpush1.msra.mxu0 %v363
      %411 = vmatprep.subr.mxu0 0.0
      %412 = vmatpush1.msra.mxu0 %v362
      %413 = vmatprep.subr.mxu0 0.0
      %414 = vmatpush1.msra.mxu0 %v361
      %415 = vmatprep.subr.mxu0 0.0
      %416 = vmatpush2.msra.mxu0 0.0
      %417 = vmatprep.subr.mxu0 0.0
      %418 = vmatpush2.msra.mxu0 0.0
      %419 = vmatprep.subr.mxu0 0.0
      %420 = vmatpush2.msra.mxu0 0.0
      %421 = vmatprep.subr.mxu0 0.0
      %422 = vmatpush2.msra.mxu0 0.0
      %423 = vmatprep.subr.mxu0 0.0
      %424 = vmatpush2.msra.mxu0 0.0
      %425 = vmatprep.subr.mxu0 0.0
      %426 = vmatpush2.msra.mxu0 0.0
      %427 = vmatprep.subr.mxu0 0.0
      %428 = vmatpush2.msra.mxu0 0.0
      %429 = vmatprep.subr.mxu0 0.0
      %430 = vmatpush2.msra.mxu0 0.0
      %431 = vmatprep.subr.mxu0 0.0
      %432 = vmatpush2.msra.mxu0 0.0
      %433 = vmatprep.subr.mxu0 0.0
      %434 = vmatpush2.msra.mxu0 0.0
      %435 = vmatprep.subr.mxu0 0.0
      %436 = vmatpush2.msra.mxu0 0.0
      %437 = vmatprep.subr.mxu0 0.0
      %438 = vmatpush2.msra.mxu0 0.0
      %439 = vmatprep.subr.mxu0 0.0
      %440 = vmatpush2.msra.mxu0 0.0
      %441 = vmatprep.subr.mxu0 0.0
      %442 = vmatpush2.msra.mxu0 0.0
      %443 = vmatprep.subr.mxu0 0.0
      %444 = vmatpush2.msra.mxu0 0.0
      %445 = vmatprep.subr.mxu0 0.0
      %446 = vmatpush2.msra.mxu0 0.0
      %447 = vmatprep.mubr.f32.mxu0 0.0
      %448 = vmatmul.mubr.f32.gmra.mxu0 %v378
      %v449 = vpop.f32.mrf.mxu0
      %v450 = vadd.f32 %v374, %v449
      %v451 = vpop.f32.mrf.mxu0
      %452 = vmatprep.mubr.f32.mxu0 0.0
      %453 = vmatmul.mubr.f32.gmra.mxu0 %v381
      %v454 = vpop.f32.mrf.mxu0
      %v455 = vadd.f32 %v374, %v454
      %v456 = vpop.f32.mrf.mxu0
      %457 = vdwg.mxu0
      %v458 = vmax.f32 %v450, 0.0
      %v459 = vmax.f32 %v455, 0.0
      %v460 = vld [vmem:[%s5] sm:$0xff]
      %v461 = vld [vmem:[%s5 + $0x8] sm:$0xff]
      %v462 = vld [vmem:[%s5 + $0x10] sm:$0xff]
      %v463 = vld [vmem:[%s5 + $0x18] sm:$0xff]
      %v464 = vld [vmem:[%s6] sm:$0x1]
      %v466 = vlaneseq
      %v467 = vshrl.u32 %v466, 7
      %v468 = vsub.s32 0, %v467
      %v469 = vrot.slane %v464, %v468
      %vm471 = vcmask 261120
      %v473 = vsel %vm471, %v458, 0
      %v476 = vsel %vm471, %v459, 0
      %478 = vmatprep.subr.mxu0 0.0
      %479 = vmatpush1.msra.mxu0 0.0
      %480 = vmatprep.subr.mxu0 0.0
      %481 = vmatpush1.msra.mxu0 0.0
      %482 = vmatprep.subr.mxu0 0.0
      %483 = vmatpush1.msra.mxu0 0.0
      %484 = vmatprep.subr.mxu0 0.0
      %485 = vmatpush1.msra.mxu0 0.0
      %486 = vmatprep.subr.mxu0 0.0
      %487 = vmatpush1.msra.mxu0 0.0
      %488 = vmatprep.subr.mxu0 0.0
      %489 = vmatpush1.msra.mxu0 0.0
      %490 = vmatprep.subr.mxu0 0.0
      %491 = vmatpush1.msra.mxu0 0.0
      %492 = vmatprep.subr.mxu0 0.0
      %493 = vmatpush1.msra.mxu0 0.0
      %494 = vmatprep.subr.mxu0 0.0
      %495 = vmatpush1.msra.mxu0 0.0
      %496 = vmatprep.subr.mxu0 0.0
      %497 = vmatpush1.msra.mxu0 0.0
      %498 = vmatprep.subr.mxu0 0.0
      %499 = vmatpush1.msra.mxu0 0.0
      %500 = vmatprep.subr.mxu0 0.0
      %501 = vmatpush1.msra.mxu0 0.0
      %502 = vmatprep.subr.mxu0 0.0
      %503 = vmatpush1.msra.mxu0 %v463
      %504 = vmatprep.subr.mxu0 0.0
      %505 = vmatpush1.msra.mxu0 %v462
      %506 = vmatprep.subr.mxu0 0.0
      %507 = vmatpush1.msra.mxu0 %v461
      %508 = vmatprep.subr.mxu0 0.0
      %509 = vmatpush1.msra.mxu0 %v460
      %510 = vmatprep.subr.mxu0 0.0
      %511 = vmatpush2.msra.mxu0 0.0
      %512 = vmatprep.subr.mxu0 0.0
      %513 = vmatpush2.msra.mxu0 0.0
      %514 = vmatprep.subr.mxu0 0.0
      %515 = vmatpush2.msra.mxu0 0.0
      %516 = vmatprep.subr.mxu0 0.0
      %517 = vmatpush2.msra.mxu0 0.0
      %518 = vmatprep.subr.mxu0 0.0
      %519 = vmatpush2.msra.mxu0 0.0
      %520 = vmatprep.subr.mxu0 0.0
      %521 = vmatpush2.msra.mxu0 0.0
      %522 = vmatprep.subr.mxu0 0.0
      %523 = vmatpush2.msra.mxu0 0.0
      %524 = vmatprep.subr.mxu0 0.0
      %525 = vmatpush2.msra.mxu0 0.0
      %526 = vmatprep.subr.mxu0 0.0
      %527 = vmatpush2.msra.mxu0 0.0
      %528 = vmatprep.subr.mxu0 0.0
      %529 = vmatpush2.msra.mxu0 0.0
      %530 = vmatprep.subr.mxu0 0.0
      %531 = vmatpush2.msra.mxu0 0.0
      %532 = vmatprep.subr.mxu0 0.0
      %533 = vmatpush2.msra.mxu0 0.0
      %534 = vmatprep.subr.mxu0 0.0
      %535 = vmatpush2.msra.mxu0 0.0
      %536 = vmatprep.subr.mxu0 0.0
      %537 = vmatpush2.msra.mxu0 0.0
      %538 = vmatprep.subr.mxu0 0.0
      %539 = vmatpush2.msra.mxu0 0.0
      %540 = vmatprep.subr.mxu0 0.0
      %541 = vmatpush2.msra.mxu0 0.0
      %542 = vmatprep.mubr.f32.mxu0 0.0
      %543 = vmatmul.mubr.f32.gmra.mxu0 %v473
      %v544 = vpop.f32.mrf.mxu0
      %v545 = vadd.f32 %v469, %v544
      %v546 = vpop.f32.mrf.mxu0
      %547 = vmatprep.mubr.f32.mxu0 0.0
      %548 = vmatmul.mubr.f32.gmra.mxu0 %v476
      %v549 = vpop.f32.mrf.mxu0
      %v550 = vadd.f32 %v469, %v549
      %v551 = vpop.f32.mrf.mxu0
      %552 = vdwg.mxu0
      %v553 = vmax.f32 %v545, 0.0
      %v554 = vmax.f32 %v550, 0.0
      %v555 = vld [vmem:[%s7] sm:$0x1]
      %v557 = vlaneseq
      %v558 = vshrl.u32 %v557, 7
      %v559 = vsub.s32 0, %v558
      %v560 = vrot.slane %v555, %v559
      %v562 = vmul.f32 %v553, %v560
      %v563 = vmul.f32 %v554, %v560
      %vm564 = vcmask 130048
      %v565 = vsel %vm564, %v562, 0.0
      %566 = vadd.xlane.f32.xlu0 %v565
      %v567 = vpop.xlane.xlu0 %566
      %v568 = vsel %vm564, %v563, 0.0
      %569 = vadd.xlane.f32.xlu0 %v568
      %v570 = vpop.xlane.xlu0 %569
      %v571 = vld [vmem:[%s345] sm:$0xff]
      %v572 = vld [vmem:[%s345 + $0x8] sm:$0xff]
      %v573 = vld [vmem:[%s8] sm:$0x1]
      %v575 = vlaneseq
      %v576 = vshrl.u32 %v575, 7
      %v577 = vsub.s32 0, %v576
      %v578 = vrot.slane %v573, %v577
      %v580 = vmul.f32 %v571, %v578
      %v581 = vmul.f32 %v572, %v578
      %v582 = vsel %vm471, %v580, 0.0
      %583 = vadd.xlane.f32.xlu0 %v582
      %v584 = vpop.xlane.xlu0 %583
      %v585 = vsel %vm471, %v581, 0.0
      %586 = vadd.xlane.f32.xlu0 %v585
      %v587 = vpop.xlane.xlu0 %586
      %v588 = vadd.f32 %v567, %v584
      %v589 = vadd.f32 %v570, %v587
      %s590 = sld [smem:[#allocation2]]
      %v591 = vstv %s590
      %v592 = vadd.f32 %v588, %v591
      %v593 = vadd.f32 %v589, %v591
      %v594 = vsub.f32 0.0, %v592
      %v595 = vsub.f32 0.0, %v593
      %v596 = vmul.f32 %v594, 1.442695
      %v597 = vpow.pop %v596
      %v598 = vmul.f32 %v595, 1.442695
      %v599 = vpow.pop %v598
      %v600 = vadd.f32 %v597, 1.0
      %v601 = vadd.f32 %v599, 1.0
      %v602 = vrcp.pop %v600
      %v603 = vrcp.pop %v601
      %vm604 = vcmask 7168
      %605 = vst.msk [vmem:[%s357] sm:$0xff] %vm604, %v602
      %606 = vst.msk [vmem:[%s357 + $0x8] sm:$0xff] %vm604, %v603
      %s607 = smul.u32 2, %s21
      %p608 = scmp.lt.s32.totalorder %s607, 7
      %s609 = scalar_select %p608, %s607, 7
      %s610 = smul.addr %s609, 8
      %s611 = scalar_lea.vmem %s9, %s610
      // Predicated region
      $region57: #{tpu_custom_call.1} parent=55 // pred_check
        %p612 = pneg %p238
      $region58: #{tpu_custom_call.1} parent=55 // pred_check_branch
        %614 = sbr.rel (%p612) target = $region60
      $region59: #{tpu_custom_call.1} parent=55 // pred_region
        %s615 = smul.u32 2, %s21
      $region60: #{tpu_custom_call.1} parent=55 // pred_fallthru
        _
    $region56: #{tpu_custom_call.1} parent=5 // pred_fallthru
      _
    %p616 = scmp.le.s32.totalorder 2, %s16
    // Predicated region
    $region61: #{tpu_custom_call.1} parent=5 // pred_check
      %p617 = pneg %p616
    $region62: #{tpu_custom_call.1} parent=5 // pred_check_branch
      %619 = sbr.rel (%p617) target = $region64
    $region63: #{tpu_custom_call.1} parent=5 // pred_region
      %s620 = ssub.s32 %s16, 2
      // Predicated region
      $region65: #{tpu_custom_call.1} parent=63 // pred_check
        %p621 = pneg %p244
      $region66: #{tpu_custom_call.1} parent=63 // pred_check_branch
        %623 = sbr.rel (%p621) target = $region68
      $region67: #{tpu_custom_call.1} parent=63 // pred_region
        %s624 = smul.u32 2, %s22
        %p625 = scmp.lt.s32.totalorder %s624, 7
        %s626 = scalar_select %p625, %s624, 7
        %s627 = smul.addr %s626, 8
        %s628 = scalar_lea.vmem %s9, %s627
      $region68: #{tpu_custom_call.1} parent=63 // pred_fallthru
        _
    $region64: #{tpu_custom_call.1} parent=5 // pred_fallthru
      _
  $region6: #{tpu_custom_call.1} parent=0 // loop_footer
    %s20 = sadd.s32 1, %s16
  $region7: #{tpu_custom_call.1} parent=0 // loop_footer_branch
    %15 = sbr.rel target = $region3
  $region8: #{tpu_custom_call.1} parent=0 // loop_exit
    _

</llo_original>
